<compile_context>
chip_gen: v7x
topology: tpu7x:2x2x1
jax: 0.10.0
libtpu: 0.0.40
codegen_flags: <defaults>
</compile_context>

<pallas_src>
import functools

import jax
import jax.numpy as jnp
from jax.experimental import pallas as pl
from jax.experimental.pallas import tpu as pltpu

LANES = 128


def _num_tensorcores():
    # v7x exposes 2 TensorCores per chip to Pallas; v5e/v6e have 1 (conservative default 1).
    try:
        kind = jax.devices()[0].device_kind.lower()
    except Exception:
        return 1
    return 2 if "v7" in kind else 1


def _bce_neg_sum_ref(p, t):
    """Plain-JAX negative-BCE sum (PyTorch clamped-log semantics). Used for tiny tails."""
    log_p = jnp.maximum(jnp.log(p), jnp.float32(-100.0))
    log_1mp = jnp.maximum(jnp.log(1.0 - p), jnp.float32(-100.0))
    return jnp.sum(t * (log_p - log_1mp) + log_1mp)


def _bce_partial_kernel(p_ref, t_ref, o_ref, acc_ref, *,
                        row_tile, tiles_per_core, valid_rows, needs_mask):
    """Accumulate per-core partial sums of -(BCE term) into a one-vreg VMEM accumulator."""
    i = pl.program_id(1)

    @pl.when(i == 0)
    def _():
        acc_ref[...] = jnp.zeros_like(acc_ref)

    p = p_ref[...].astype(jnp.float32)
    t = t_ref[...].astype(jnp.float32)
    # PyTorch BCELoss clamps log values at -100 to avoid inf * 0 = nan.
    log_p = jnp.maximum(jnp.log(p), jnp.float32(-100.0))
    log_1mp = jnp.maximum(jnp.log(1.0 - p), jnp.float32(-100.0))
    # Negative of the per-element BCE; the final negation happens once in the wrapper.
    term = t * (log_p - log_1mp) + log_1mp

    groups = row_tile // 8  # fold (row_tile,128) -> (groups,8,128) -> sum -> one (8,128) vreg

    if not needs_mask:
        # Static guarantee: every grid step maps to a full, fully-valid tile.
        acc_ref[...] += term.reshape(groups, 8, LANES).sum(axis=0)
    else:
        # Global block index (UNclamped; the index_map clamps the DMA; invalid rows are
        # masked out below). All index math is in ROWS, so int32 is safe up to 2^31 rows.
        b = pl.program_id(0) * tiles_per_core + i
        block_start = b * row_tile

        @pl.when(block_start + row_tile <= valid_rows)
        def _():  # hot path: full tile, no mask work at all
            acc_ref[...] += term.reshape(groups, 8, LANES).sum(axis=0)

        @pl.when(block_start + row_tile > valid_rows)
        def _():  # at most one partial/overhang tile per core: row-granularity mask
            row_ids = jax.lax.broadcasted_iota(jnp.int32, (row_tile, 1), 0)
            valid = (block_start + row_ids) < valid_rows
            # NOTE: must stay a select (jnp.where), not a mask-multiply — invalid rows hold
            # garbage whose log() may be NaN/-inf, and NaN * 0 = NaN.
            masked = jnp.where(valid, term, jnp.float32(0.0))
            acc_ref[...] += masked.reshape(groups, 8, LANES).sum(axis=0)

    @pl.when(i == pl.num_programs(1) - 1)
    def _():
        # Single cross-lane reduce of one vreg, once per core.
        o_ref[0, 0] = jnp.sum(acc_ref[...])


@functools.partial(jax.jit, static_argnames=("row_tile", "num_splits"))
def binary_cross_entropy_loss(pred_score, true_score, *, row_tile=1024, num_splits=None):
    assert pred_score.shape == true_score.shape
    n_elems = pred_score.size
    assert n_elems > 0
    out_dtype = pred_score.dtype

    p_flat = pred_score.reshape(-1)
    t_flat = true_score.reshape(-1)

    rows = n_elems // LANES
    rem = n_elems - rows * LANES

    # Tiny inputs: not worth a kernel launch — do it in plain JAX.
    if rows < 8:
        loss = -_bce_neg_sum_ref(p_flat.astype(jnp.float32),
                                 t_flat.astype(jnp.float32)) / jnp.float32(n_elems)
        return loss.astype(out_dtype)

    # <128-element tail handled in plain JAX (no full-array jnp.pad copy, and the kernel
    # never needs a lane-level mask).
    tail_sum = jnp.float32(0.0)
    if rem:
        # TODO(synk): the prefix slice still copies the bulk arrays when n % 128 != 0; a
        # fully copy-free misaligned path would need a 1-D BlockSpec over the flat array.
        tail_sum = _bce_neg_sum_ref(p_flat[rows * LANES:].astype(jnp.float32),
                                    t_flat[rows * LANES:].astype(jnp.float32))
        p_flat = p_flat[: rows * LANES]
        t_flat = t_flat[: rows * LANES]

    p2d = p_flat.reshape(rows, LANES)  # zero-cost reshape, lane-dense slab
    t2d = t_flat.reshape(rows, LANES)

    # Tile sizing: clamp for small inputs, keep a multiple of 8 sublanes.
    row_tile = max(8, min(row_tile, rows))
    row_tile = ((row_tile + 7) // 8) * 8
    tiles_total = pl.cdiv(rows, row_tile)

    if num_splits is None:
        num_splits = _num_tensorcores()      # megacore split only helps on v7x
    num_splits = max(1, min(num_splits, tiles_total))
    tiles_per_core = pl.cdiv(tiles_total, num_splits)

    # Only emit / run mask code if some grid step can touch invalid rows.
    needs_mask = (rows % row_tile != 0) or (num_splits * tiles_per_core != tiles_total)

    def tile_map(c, i):
        # Clamp so overhang iterations (uneven split) re-read the last valid block; their
        # contribution is masked to zero inside the kernel.
        return (jnp.minimum(c * tiles_per_core + i, tiles_total - 1), 0)

    kernel = functools.partial(_bce_partial_kernel,
                               row_tile=row_tile, tiles_per_core=tiles_per_core,
                               valid_rows=rows, needs_mask=needs_mask)

    elem_bytes = p2d.dtype.itemsize + t2d.dtype.itemsize
    partials = pl.pallas_call(
        kernel,
        out_shape=jax.ShapeDtypeStruct((num_splits, 1), jnp.float32),
        grid_spec=pltpu.PrefetchScalarGridSpec(
            num_scalar_prefetch=0,
            grid=(num_splits, tiles_per_core),
            in_specs=[
                pl.BlockSpec((row_tile, LANES), tile_map),
                pl.BlockSpec((row_tile, LANES), tile_map),
            ],
            out_specs=pl.BlockSpec((1, 1), lambda c, i: (c, 0),
                                   memory_space=pltpu.SMEM),
            # One f32 vreg per core; fine precision-wise for typical sizes (each slot sums
            # ~n/1024 clamped terms).
            scratch_shapes=[pltpu.VMEM((8, LANES), jnp.float32)],
        ),
        compiler_params=pltpu.CompilerParams(
            dimension_semantics=("parallel", "arbitrary"),
        ),
        cost_estimate=pl.CostEstimate(
            flops=6 * n_elems,
            transcendentals=2 * n_elems,
            bytes_accessed=n_elems * elem_bytes + 4 * num_splits,
        ),
    )(p2d, t2d)

    # reduction='mean' over the ORIGINAL element count; single negation here.
    loss = -(jnp.sum(partials) + tail_sum) / jnp.float32(n_elems)
    return loss.astype(out_dtype)


if __name__ == "__main__":
    key = jax.random.PRNGKey(0)
    k_pred, k_true = jax.random.split(key)

    # BCELoss expects predictions in (0, 1) and targets in [0, 1].
    shape = (2, 4, 16, 16)
    pred_score = jax.nn.sigmoid(jax.random.normal(k_pred, shape, dtype=jnp.float32))
    true_score = jax.random.bernoulli(k_true, p=0.5, shape=shape).astype(jnp.float32)

    loss = binary_cross_entropy_loss(pred_score, true_score)
    loss = jax.block_until_ready(loss)

    # Pure-JAX reference (same clamped-log semantics as PyTorch BCELoss).
    log_p = jnp.maximum(jnp.log(pred_score), -100.0)
    log_1mp = jnp.maximum(jnp.log(1.0 - pred_score), -100.0)
    ref = jnp.mean(-(true_score * log_p + (1.0 - true_score) * log_1mp))
    assert jnp.allclose(loss, ref, rtol=1e-5, atol=1e-6), (loss, ref)

    print("KERNEL_OK")
</pallas_src>

<mosaic_0001>
module attributes {stable_mosaic.version = 11 : i64} {
  func.func @_bce_partial_kernel(%arg0: i32, %arg1: i32, %arg2: memref<16x128xf32, #tpu.memory_space<vmem>>, %arg3: memref<16x128xf32, #tpu.memory_space<vmem>>, %arg4: memref<1x1xf32, #tpu.memory_space<smem>>, %arg5: memref<8x128xf32, #tpu.memory_space<vmem>>) attributes {dimension_semantics = [#tpu.dimension_semantics<parallel>, #tpu.dimension_semantics<arbitrary>], iteration_bounds = array<i64: 1, 1>, scalar_prefetch = 0 : i64, scratch_operands = 1 : i64, tpu.core_type = #tpu.core_type<tc>, window_params = [{transform_indices = @transform_0, window_bounds = array<i64: 16, 128>}, {transform_indices = @transform_1, window_bounds = array<i64: 16, 128>}, {transform_indices = @transform_2, window_bounds = array<i64: 1, 1>}]} {
    %c0_i32 = arith.constant 0 : i32
    %0 = arith.cmpi eq, %arg1, %c0_i32 : i32
    %1 = arith.extui %0 : i1 to i32
    %c0_i32_0 = arith.constant 0 : i32
    %2 = arith.cmpi ne, %1, %c0_i32_0 : i32
    scf.if %2 {
      %cst_13 = arith.constant 0.000000e+00 : f32
      %24 = vector.broadcast %cst_13 : f32 to vector<8x128xf32>
      %c0_14 = arith.constant 0 : index
      %c0_15 = arith.constant 0 : index
      %25 = vector.load %arg5[%c0_14, %c0_15] : memref<8x128xf32, #tpu.memory_space<vmem>>, vector<8x128xf32>
      tpu.vector_store %arg5[%c0_14, %c0_15], %24 {strides = array<i32>} : memref<8x128xf32, #tpu.memory_space<vmem>>, vector<8x128xf32>,
    } else {
    }
    %c0 = arith.constant 0 : index
    %c0_1 = arith.constant 0 : index
    %3 = vector.load %arg2[%c0, %c0_1] : memref<16x128xf32, #tpu.memory_space<vmem>>, vector<16x128xf32>
    %c0_2 = arith.constant 0 : index
    %c0_3 = arith.constant 0 : index
    %4 = vector.load %arg3[%c0_2, %c0_3] : memref<16x128xf32, #tpu.memory_space<vmem>>, vector<16x128xf32>
    %5 = math.log %3 : vector<16x128xf32>
    %cst = arith.constant -1.000000e+02 : f32
    %6 = vector.broadcast %cst : f32 to vector<16x128xf32>
    %7 = arith.maximumf %5, %6 : vector<16x128xf32>
    %cst_4 = arith.constant 1.000000e+00 : f32
    %8 = vector.broadcast %cst_4 : f32 to vector<16x128xf32>
    %9 = arith.subf %8, %3 : vector<16x128xf32>
    %10 = math.log %9 : vector<16x128xf32>
    %cst_5 = arith.constant -1.000000e+02 : f32
    %11 = vector.broadcast %cst_5 : f32 to vector<16x128xf32>
    %12 = arith.maximumf %10, %11 : vector<16x128xf32>
    %13 = arith.subf %7, %12 : vector<16x128xf32>
    %14 = arith.mulf %4, %13 : vector<16x128xf32>
    %15 = arith.addf %14, %12 : vector<16x128xf32>
    %c0_6 = arith.constant 0 : index
    %c0_7 = arith.constant 0 : index
    %16 = vector.load %arg5[%c0_6, %c0_7] : memref<8x128xf32, #tpu.memory_space<vmem>>, vector<8x128xf32>
    %17 = vector.shape_cast %15 : vector<16x128xf32> to vector<2x8x128xf32>
    %cst_8 = arith.constant dense<0.000000e+00> : vector<8x128xf32>
    %18 = vector.multi_reduction <add>, %17, %cst_8 [0] : vector<2x8x128xf32> to vector<8x128xf32>
    %19 = arith.addf %16, %18 : vector<8x128xf32>
    %c0_9 = arith.constant 0 : index
    %c0_10 = arith.constant 0 : index
    %20 = vector.load %arg5[%c0_9, %c0_10] : memref<8x128xf32, #tpu.memory_space<vmem>>, vector<8x128xf32>
    tpu.vector_store %arg5[%c0_9, %c0_10], %19 {strides = array<i32>} : memref<8x128xf32, #tpu.memory_space<vmem>>, vector<8x128xf32>,
    %c0_i32_11 = arith.constant 0 : i32
    %21 = arith.cmpi eq, %arg1, %c0_i32_11 : i32
    %22 = arith.extui %21 : i1 to i32
    %c0_i32_12 = arith.constant 0 : i32
    %23 = arith.cmpi ne, %22, %c0_i32_12 : i32
    scf.if %23 {
      %c0_13 = arith.constant 0 : index
      %c0_14 = arith.constant 0 : index
      %24 = vector.load %arg5[%c0_13, %c0_14] : memref<8x128xf32, #tpu.memory_space<vmem>>, vector<8x128xf32>
      %25 = vector.shape_cast %24 : vector<8x128xf32> to vector<1x8x128xf32>
      %cst_15 = arith.constant dense<0.000000e+00> : vector<1xf32>
      %26 = vector.multi_reduction <add>, %25, %cst_15 [1, 2] : vector<1x8x128xf32> to vector<1xf32>
      %27 = vector.shape_cast %26 : vector<1xf32> to vector<1x1x1xf32>
      %28 = vector.extract %27[0, 0, 0] : f32 from vector<1x1x1xf32>
      %c0_16 = arith.constant 0 : index
      %c0_17 = arith.constant 0 : index
      %29 = memref.load %arg4[%c0_16, %c0_17] : memref<1x1xf32, #tpu.memory_space<smem>>
      memref.store %28, %arg4[%c0_16, %c0_17] : memref<1x1xf32, #tpu.memory_space<smem>>
    } else {
    }
    return
  }
  func.func @transform_0(%arg0: i32, %arg1: i32) -> (i32, i32) {
    %c1_i32 = arith.constant 1 : i32
    %0 = arith.muli %arg0, %c1_i32 : i32
    %1 = arith.addi %0, %arg1 : i32
    %c0_i32 = arith.constant 0 : i32
    %2 = arith.minsi %1, %c0_i32 : i32
    %c0_i32_0 = arith.constant 0 : i32
    %c0_i32_1 = arith.constant 0 : i32
    return %2, %c0_i32_0 : i32, i32
  }
  func.func @transform_1(%arg0: i32, %arg1: i32) -> (i32, i32) {
    %c1_i32 = arith.constant 1 : i32
    %0 = arith.muli %arg0, %c1_i32 : i32
    %1 = arith.addi %0, %arg1 : i32
    %c0_i32 = arith.constant 0 : i32
    %2 = arith.minsi %1, %c0_i32 : i32
    %c0_i32_0 = arith.constant 0 : i32
    %c0_i32_1 = arith.constant 0 : i32
    return %2, %c0_i32_0 : i32, i32
  }
  func.func @transform_2(%arg0: i32, %arg1: i32) -> (i32, i32) {
    %c0_i32 = arith.constant 0 : i32
    %c0_i32_0 = arith.constant 0 : i32
    return %arg0, %c0_i32 : i32, i32
  }
}

</mosaic_0001>

<llo_original>
// kernel: binary_cross_entropy_loss.1
$region0: #{binary_cross_entropy_loss.1}
  #allocation0 [shape = 'u32[]', space=smem, size = 0x4, offset = 0x4, fixed_abs, tag = 'smem constant byte address 0x4 - core index']
  #allocation1 [shape = 'u32[144,128]{1,0:T(1,128)}', space=vmem, size = 0x12000, scoped, tag = 'internal scratch']
  #allocation2 [shape = 'f32[8,128]{1,0:T(8,128)}', space=vmem, size = 0x1000, scoped, tag = 'scratch operand']
  %s0 = inlined_call_operand.vmem [shape: f32[16,128], index: 0, kind: input, shape index: {}]
  %s1 = inlined_call_operand.vmem [shape: f32[16,128], index: 1, kind: input, shape index: {}]
  %s2 = inlined_call_operand.hbm [shape: f32[1,1], index: 2, kind: output, shape index: {}]
  %s3 = sld [smem:[#allocation0]]
  $region26: #{binary_cross_entropy_loss.1} parent=0
    _
  %s5 = ssub.s32 1, %s3
  %s6 = scalar_select 0, %s5, %s3
  $region1: #{binary_cross_entropy_loss.1} parent=0
    #allocation3 [shape = 'u8[512]{0}', space=smem, size = 0x200, scoped, tag = 'output window, operand 0, single buffered']
    #allocation4 [shape = 's32[1]{0}', space=sflag, size = 0x4, scoped, tag = 'scoped memory for binary_cross_entropy_loss.1']
    %7 = vsyncpa [#allocation4], 0
    // Predicated region
    $region2: #{binary_cross_entropy_loss.1} parent=1 // pred_check
      _
    $region3: #{binary_cross_entropy_loss.1} parent=1 // pred_check_branch
      %9 = sbr.rel (0) target = $region5
    $region4: #{binary_cross_entropy_loss.1} parent=1 // pred_region
      %s10 = sadd.s32 0, 0
      %p11 = scmp.lt.s32.totalorder %s10, 0
      %s12 = scalar_select %p11, %s10, 0
      %s13 = smul.u32 2, %s12
      %p14 = scmp.lt.s32.totalorder %s13, 1
      %s15 = scalar_select %p14, %s13, 1
      %s16 = smul.addr %s15, 8
      %s17 = scalar_lea.vmem %s0, %s16
      %s18 = sadd.s32 0, 0
      %p19 = scmp.lt.s32.totalorder %s18, 0
      %s20 = scalar_select %p19, %s18, 0
      %s21 = smul.u32 2, %s20
    $region5: #{binary_cross_entropy_loss.1} parent=1 // pred_fallthru
      _
    // Predicated region
    $region6: #{binary_cross_entropy_loss.1} parent=1 // pred_check
      _
    $region7: #{binary_cross_entropy_loss.1} parent=1 // pred_check_branch
      %23 = sbr.rel (0) target = $region9
    $region8: #{binary_cross_entropy_loss.1} parent=1 // pred_region
      %s24 = sadd.s32 0, 0
      %p25 = scmp.lt.s32.totalorder %s24, 0
      %s26 = scalar_select %p25, %s24, 0
      %s27 = smul.u32 2, %s26
      %p28 = scmp.lt.s32.totalorder %s27, 1
      %s29 = scalar_select %p28, %s27, 1
      %s30 = smul.addr %s29, 8
      %s31 = scalar_lea.vmem %s1, %s30
      %s32 = sadd.s32 0, 0
      %p33 = scmp.lt.s32.totalorder %s32, 0
      %s34 = scalar_select %p33, %s32, 0
      %s35 = smul.u32 2, %s34
    $region9: #{binary_cross_entropy_loss.1} parent=1 // pred_fallthru
      _
    %s36 = sadd.s32 0, 0
    %p37 = scmp.lt.s32.totalorder %s36, 0
    %s38 = scalar_select %p37, %s36, 0
    %s39 = smul.u32 2, %s38
    %p40 = scmp.lt.s32.totalorder %s39, 1
    %s41 = scalar_select %p40, %s39, 1
    %s42 = smul.addr %s41, 8
    %s43 = scalar_lea.vmem %s0, %s42
    %s44 = sadd.s32 0, 0
    %p45 = scmp.lt.s32.totalorder %s44, 0
    %s46 = scalar_select %p45, %s44, 0
    %s47 = smul.u32 2, %s46
    %p48 = scmp.lt.s32.totalorder %s47, 1
    %s49 = scalar_select %p48, %s47, 1
    %s50 = smul.addr %s49, 8
    %s51 = scalar_lea.vmem %s1, %s50
    %s52 = sadd.s32 0, 0
    %p53 = scmp.lt.s32.totalorder %s52, 0
    %s54 = scalar_select %p53, %s52, 0
    %s55 = smul.u32 2, %s54
    %p56 = scmp.lt.s32.totalorder %s55, 1
    %s57 = scalar_select %p56, %s55, 1
    %s58 = smul.addr %s57, 8
    %s59 = scalar_lea.vmem %s0, %s58
    %s60 = sadd.s32 0, 0
    %p61 = scmp.lt.s32.totalorder %s60, 0
    %s62 = scalar_select %p61, %s60, 0
    %s63 = smul.u32 2, %s62
    %s64 = sadd.s32 0, 0
    %p65 = scmp.lt.s32.totalorder %s64, 0
    %s66 = scalar_select %p65, %s64, 0
    %s67 = smul.u32 2, %s66
    %p68 = scmp.lt.s32.totalorder %s67, 1
    %s69 = scalar_select %p68, %s67, 1
    %s70 = smul.addr %s69, 8
    %s71 = scalar_lea.vmem %s1, %s70
    %s72 = sadd.s32 0, 0
    %p73 = scmp.lt.s32.totalorder %s72, 0
    %s74 = scalar_select %p73, %s72, 0
    %s75 = smul.u32 2, %s74
    %p76 = scmp.eq.s32.totalorder 0, 0
    // Predicated region
    $region10: #{binary_cross_entropy_loss.1} parent=1 // pred_check
      %p77 = pneg %p76
    $region11: #{binary_cross_entropy_loss.1} parent=1 // pred_check_branch
      %79 = sbr.rel (%p77) target = $region13
    $region12: #{binary_cross_entropy_loss.1} parent=1 // pred_region
      %80 = vst [vmem:[#allocation2] sm:$0xff] 0.0
    $region13: #{binary_cross_entropy_loss.1} parent=1 // pred_fallthru
      _
    %v81 = vld [vmem:[%s59] sm:$0xff]
    %v82 = vld [vmem:[%s59 + $0x8] sm:$0xff]
    %v83 = vld [vmem:[%s71] sm:$0xff]
    %v84 = vld [vmem:[%s71 + $0x8] sm:$0xff]
    %v85 = vlog2.pop %v81
    %v86 = vmul.f32 %v85, 0.6931472
    %v87 = vlog2.pop %v82
    %v88 = vmul.f32 %v87, 0.6931472
    %v89 = vmax.f32 %v86, -100.0
    %v90 = vmax.f32 %v88, -100.0
    %v91 = vsub.f32 1.0, %v81
    %v92 = vsub.f32 1.0, %v82
    %v93 = vlog2.pop %v91
    %v94 = vmul.f32 %v93, 0.6931472
    %v95 = vlog2.pop %v92
    %v96 = vmul.f32 %v95, 0.6931472
    %v97 = vmax.f32 %v94, -100.0
    %v98 = vmax.f32 %v96, -100.0
    %v99 = vsub.f32 %v89, %v97
    %v100 = vsub.f32 %v90, %v98
    %v101 = vmul.f32 %v83, %v99
    %v102 = vmul.f32 %v84, %v100
    %v103 = vadd.f32 %v101, %v97
    %v104 = vadd.f32 %v102, %v98
    %v105 = vld [vmem:[#allocation2] sm:$0xff]
    %v106 = vadd.f32 %v103, %v104
    %v107 = vadd.f32 %v105, %v106
    %108 = vst [vmem:[#allocation2] sm:$0xff] %v107
    // Predicated region
    $region14: #{binary_cross_entropy_loss.1} parent=1 // pred_check
      %p109 = pneg %p76
    $region15: #{binary_cross_entropy_loss.1} parent=1 // pred_check_branch
      %111 = sbr.rel (%p109) target = $region17
    $region16: #{binary_cross_entropy_loss.1} parent=1 // pred_region
      %v112 = vld [vmem:[#allocation2] sm:$0xff]
      %113 = vadd.xlane.f32.xlu0 %v112
      %v114 = vpop.xlane.xlu0 %113
      %v115 = vrot.slane %v114, 4
      %v116 = vadd.f32 %v114, %v115
      %v117 = vrot.slane %v116, 2
      %v118 = vadd.f32 %v116, %v117
      %v119 = vrot.slane %v118, 1
      %v120 = vadd.f32 %v118, %v119
      %s121 = vtos %v120
      %s122 = scalar_lea.smem [#allocation3], 0
      %123 = sst [smem:[%s122]] %s121
    $region17: #{binary_cross_entropy_loss.1} parent=1 // pred_fallthru
      _
    // Predicated region
    $region18: #{binary_cross_entropy_loss.1} parent=1 // pred_check
      _
    $region19: #{binary_cross_entropy_loss.1} parent=1 // pred_check_branch
      %125 = sbr.rel (0) target = $region21
    $region20: #{binary_cross_entropy_loss.1} parent=1 // pred_region
      %s127 = ssub.s32 16, 16
      %128 = vsyncadd [#allocation4], %s127
      %131 = dma.smem_to_hbm [#allocation3], 16, %s2, [#allocation4]
    $region21: #{binary_cross_entropy_loss.1} parent=1 // pred_fallthru
      _
    // Predicated region
    $region22: #{binary_cross_entropy_loss.1} parent=1 // pred_check
      _
    $region23: #{binary_cross_entropy_loss.1} parent=1 // pred_check_branch
      %133 = sbr.rel (0) target = $region25
    $region24: #{binary_cross_entropy_loss.1} parent=1 // pred_region
      %134 = dma.done [#allocation4], 16
    $region25: #{binary_cross_entropy_loss.1} parent=1 // pred_fallthru
      _
    %135 = sfence
    %136 = vsyncpa [#allocation4], 1

</llo_original>
